<compile_context>
chip_gen: v7x
topology: tpu7x:2x2x1
jax: 0.10.0
libtpu: 0.0.40
codegen_flags: <defaults>
</compile_context>

<pallas_src>
import functools

import jax
import jax.numpy as jnp
from jax.experimental import pallas as pl
from jax.experimental.pallas import tpu as pltpu

_MIB = 1024 * 1024


def _round_up(x, m):
    return ((x + m - 1) // m) * m


def _vmem_budget_bytes():
    """Usable VMEM per generation: physical capacity minus pipeline headroom."""
    try:
        cap = int(pltpu.get_tpu_info().vmem_capacity_bytes)
    except Exception:
        cap = 64 * _MIB  # conservative (v7x) fallback
    return max(min(cap * 7 // 8, cap - 8 * _MIB), 16 * _MIB)


def _grid_constant_spec(block_shape, index_map):
    """Single-buffer a grid-constant input (its block index never changes)."""
    if hasattr(pl, "Buffered"):
        try:
            return pl.BlockSpec(block_shape, index_map,
                                pipeline_mode=pl.Buffered(1))
        except TypeError:
            pass
    return pl.BlockSpec(block_shape, index_map)


def _choose_row_tile(n_rows8, tm_cap):
    """Largest multiple-of-8 row tile <= tm_cap, preferring a divisor of
    n_rows8 so no wrapper-side pad / output-slice copy is needed."""
    tm_cap = max(8, (tm_cap // 8) * 8)
    limit = min(tm_cap, n_rows8)
    best_div, t = 8, 8
    while t <= limit:
        if n_rows8 % t == 0:
            best_div = t
        t += 8
    if best_div >= min(tm_cap, 128) or n_rows8 <= 256:
        return best_div
    # Divisors of n_rows8 are all tiny; a padded large tile beats many 8-row
    # grid steps.  TODO(synk): in-kernel ragged-row masking would avoid the pad.
    return limit


def _layer_norm_rows_f32(x_f32, gamma_f32, beta_f32, eps, feat):
    """a_2 * (x - mean) / (std + eps) + b_2 with unbiased std, in f32."""
    mean = jnp.mean(x_f32, axis=-1, keepdims=True)
    centered = x_f32 - mean
    var = jnp.sum(centered * centered, axis=-1, keepdims=True) * (1.0 / (feat - 1))
    # One reciprocal per row instead of a divide across (TM, D). Exact
    # (approx=False) to preserve the tight numerical tolerance.
    inv = pl.reciprocal(jnp.sqrt(var) + eps, approx=False)
    return gamma_f32 * (centered * inv) + beta_f32


def _slc_kernel_resident_w(x_ref, gamma_ref, beta_ref, w_ref, b_ref, o_ref,
                           *, scale, eps, feat):
    """W fully resident (single-buffered); one grid axis over row tiles."""
    x = x_ref[...].astype(jnp.float32)
    normed = _layer_norm_rows_f32(x,
                                  gamma_ref[...].astype(jnp.float32),
                                  beta_ref[...].astype(jnp.float32),
                                  eps, feat)
    y = jnp.dot(normed.astype(w_ref.dtype), w_ref[...],
                preferred_element_type=jnp.float32)
    y = y + b_ref[...].astype(jnp.float32)
    # dropout (eval mode): identity
    o_ref[...] = (x + scale * y).astype(o_ref.dtype)


def _slc_kernel_tiled_w(x_ref, gamma_ref, beta_ref, w_ref, b_ref, o_ref,
                        normed_ref, *, scale, eps, feat, col_tile):
    """W streamed as (D, TN) column tiles; LayerNorm computed once per row
    tile; residual columns sliced from the resident (TM, D) x tile."""
    j = pl.program_id(1)

    @pl.when(j == 0)
    def _():
        x = x_ref[...].astype(jnp.float32)
        normed = _layer_norm_rows_f32(x,
                                      gamma_ref[...].astype(jnp.float32),
                                      beta_ref[...].astype(jnp.float32),
                                      eps, feat)
        normed_ref[...] = normed.astype(normed_ref.dtype)

    y = jnp.dot(normed_ref[...], w_ref[...], preferred_element_type=jnp.float32)
    y = y + b_ref[...].astype(jnp.float32)
    off = pl.multiple_of(j * col_tile, 128)
    x_res = x_ref[:, pl.ds(off, col_tile)].astype(jnp.float32)
    # dropout (eval mode): identity
    o_ref[...] = (x_res + scale * y).astype(o_ref.dtype)


def sublayer_connection(x, gamma, beta, w, b, *, scale=1.0, eps=1e-6,
                        row_tile=None, col_tile=None, matmul_dtype=None,
                        vmem_limit_bytes=None):
    """out = x + scale * (LayerNorm(x) @ W + b)   (eval-mode dropout = identity)

    x: (B, T, D); gamma, beta, b: (D,); w: (D, D).
    """
    B, T, D = x.shape
    N = B * T
    x_item = jnp.dtype(x.dtype).itemsize

    # Matmul / weight dtype. Defaults to W's dtype so f32 weights keep exact
    # f32 MXU results; pass matmul_dtype=jnp.bfloat16 to trade precision for
    # ~3x MXU throughput and half the W VMEM/HBM footprint.
    mm_dtype = jnp.dtype(w.dtype if matmul_dtype is None else matmul_dtype)
    mm_item = mm_dtype.itemsize
    w_mm = w if w.dtype == mm_dtype else w.astype(mm_dtype)

    budget = _vmem_budget_bytes()
    n_rows8 = _round_up(max(N, 8), 8)
    small_consts = 6 * D * 4
    slack = 2 * _MIB

    # Rows per tile that still fit with W fully resident (single-buffered W;
    # x in + out double-buffered).
    w_bytes = D * D * mm_item
    tm_cap_res = (budget - w_bytes - small_consts - slack) // max(4 * D * x_item, 1)
    tm_cap_res = min(int(tm_cap_res), 1024)

    if col_tile is not None:
        use_resident = int(col_tile) == D
    else:
        # Keep W resident whenever it fits alongside >=64-row tiles (avoids
        # re-streaming W once per row tile); D not a multiple of 128 forces
        # the full-width path.
        use_resident = (D % 128 != 0) or (tm_cap_res >= 64)

    # ----------------------------- plan tiling -----------------------------
    if use_resident:
        TN = D
        num_col_tiles = 1
        if row_tile is None:
            TM = _choose_row_tile(n_rows8, max(tm_cap_res, 8))
        else:
            TM = int(row_tile)
        assert TM % 8 == 0, "row tile must be a multiple of 8 (sublane)"
        N_pad = _round_up(N, TM)
        num_row_tiles = N_pad // TM
        # v7x megacore: give both TensorCores a row tile when N is large.
        if row_tile is None and num_row_tiles == 1 and N_pad >= 256 and TM % 16 == 0:
            TM //= 2
            num_row_tiles = N_pad // TM
        est = w_bytes + 4 * TM * D * x_item + small_consts
    else:
        assert D % 128 == 0, "streamed-W path requires D % 128 == 0"
        if col_tile is None:
            TN = 128
            for cand in (512, 256, 128):
                if D % cand:
                    continue
                cap = (budget - 2 * D * cand * mm_item - small_consts - slack) // \
                      max(2 * D * x_item + 2 * cand * x_item + D * mm_item, 1)
                if cap >= 256:   # big row tiles cut W re-streaming the most
                    TN = cand
                    break
        else:
            TN = int(col_tile)
        assert D % TN == 0 and TN % 128 == 0, "column tile must divide D and be lane-aligned"
        num_col_tiles = D // TN
        tm_cap_str = (budget - 2 * D * TN * mm_item - small_consts - slack) // \
                     max(2 * D * x_item + 2 * TN * x_item + D * mm_item, 1)
        tm_cap_str = min(int(tm_cap_str), 1024)
        if row_tile is None:
            TM = _choose_row_tile(n_rows8, max(tm_cap_str, 8))
        else:
            TM = int(row_tile)
        assert TM % 8 == 0, "row tile must be a multiple of 8 (sublane)"
        N_pad = _round_up(N, TM)
        num_row_tiles = N_pad // TM
        # TODO(synk): if num_row_tiles == 1 on v7x, the column axis could be
        # made the parallel one instead.
        est = (2 * TM * D * x_item + 2 * TM * TN * x_item
               + 2 * D * TN * mm_item + TM * D * mm_item + small_consts)

    # --------------------------- prepare operands --------------------------
    x2 = x.reshape(N, D)
    if N_pad != N:
        # TODO(synk): in-kernel ragged-row masking would avoid this HBM copy;
        # the tile chooser already prefers divisors of N so this is rare/small.
        x2 = jnp.pad(x2, ((0, N_pad - N), (0, 0)))
    gamma2 = gamma.reshape(1, D)
    beta2 = beta.reshape(1, D)
    b2 = b.reshape(1, D)

    if vmem_limit_bytes is None:
        vmem_limit_bytes = int(min(budget, max(est * 5 // 4 + 2 * _MIB, 32 * _MIB)))

    w_hbm_bytes = (1 if use_resident else num_row_tiles) * D * D * mm_item
    cost = pl.CostEstimate(
        flops=int(2 * N_pad * D * D + 10 * N_pad * D),
        transcendentals=int(2 * N_pad),                      # sqrt + recip / row
        bytes_accessed=int(2 * N_pad * D * x_item            # read x, write out
                           + w_hbm_bytes                     # W traffic (path-specific)
                           + 3 * D * 4),
    )

    # ------------------------------ launch ---------------------------------
    if use_resident:
        kernel = functools.partial(_slc_kernel_resident_w, scale=float(scale),
                                   eps=float(eps), feat=D)
        out2 = pl.pallas_call(
            kernel,
            out_shape=jax.ShapeDtypeStruct((N_pad, D), x.dtype),
            grid_spec=pltpu.PrefetchScalarGridSpec(
                num_scalar_prefetch=0,
                grid=(num_row_tiles,),
                in_specs=[
                    pl.BlockSpec((TM, D), lambda i: (i, 0)),          # x rows
                    _grid_constant_spec((1, D), lambda i: (0, 0)),    # gamma
                    _grid_constant_spec((1, D), lambda i: (0, 0)),    # beta
                    _grid_constant_spec((D, D), lambda i: (0, 0)),    # W (resident)
                    _grid_constant_spec((1, D), lambda i: (0, 0)),    # bias
                ],
                out_specs=pl.BlockSpec((TM, D), lambda i: (i, 0)),
            ),
            compiler_params=pltpu.CompilerParams(
                dimension_semantics=("parallel",),
                vmem_limit_bytes=vmem_limit_bytes),
            cost_estimate=cost,
        )(x2, gamma2, beta2, w_mm, b2)
    else:
        kernel = functools.partial(_slc_kernel_tiled_w, scale=float(scale),
                                   eps=float(eps), feat=D, col_tile=TN)
        out2 = pl.pallas_call(
            kernel,
            out_shape=jax.ShapeDtypeStruct((N_pad, D), x.dtype),
            grid_spec=pltpu.PrefetchScalarGridSpec(
                num_scalar_prefetch=0,
                grid=(num_row_tiles, num_col_tiles),
                in_specs=[
                    # x rows: used for LayerNorm (j==0) AND as the residual
                    # source for every column tile (sliced in-kernel).
                    pl.BlockSpec((TM, D), lambda i, j: (i, 0)),
                    _grid_constant_spec((1, D), lambda i, j: (0, 0)),  # gamma
                    _grid_constant_spec((1, D), lambda i, j: (0, 0)),  # beta
                    pl.BlockSpec((D, TN), lambda i, j: (0, j)),        # W column tile
                    pl.BlockSpec((1, TN), lambda i, j: (0, j)),        # bias cols
                ],
                out_specs=pl.BlockSpec((TM, TN), lambda i, j: (i, j)),
                scratch_shapes=[pltpu.VMEM((TM, D), mm_dtype)],        # normed rows
            ),
            compiler_params=pltpu.CompilerParams(
                # Column axis stays sequential ("arbitrary"): the normed
                # scratch is written at j == 0 and reused for the remaining
                # column tiles of the same row tile. Row axis stays "parallel"
                # so megacore (v7x) can shard row tiles across TensorCores.
                dimension_semantics=("parallel", "arbitrary"),
                vmem_limit_bytes=vmem_limit_bytes),
            cost_estimate=cost,
        )(x2, gamma2, beta2, w_mm, b2)

    if N_pad != N:
        out2 = out2[:N]
    return out2.reshape(B, T, D)


def _reference(x, gamma, beta, w, b, scale, eps=1e-6):
    xf = x.astype(jnp.float32)
    mean = jnp.mean(xf, axis=-1, keepdims=True)
    centered = xf - mean
    var = jnp.sum(centered * centered, axis=-1, keepdims=True) / (x.shape[-1] - 1)
    std = jnp.sqrt(var)
    normed = gamma * centered / (std + eps) + beta
    y = normed @ w + b
    return (xf + scale * y).astype(x.dtype)


if __name__ == "__main__":
    B, T, D = 2, 64, 256
    key = jax.random.PRNGKey(0)
    kx, kw, kb = jax.random.split(key, 3)

    x = jax.random.normal(kx, (B, T, D), dtype=jnp.float32)

    # LayerNorm params (deterministic init, as in the module's __init__)
    gamma = jnp.ones((D,), dtype=jnp.float32)
    beta = jnp.zeros((D,), dtype=jnp.float32)

    # Deterministic sublayer (Linear(D, D)) params
    w = jax.random.normal(kw, (D, D), dtype=jnp.float32) * 0.05
    b = jax.random.normal(kb, (D,), dtype=jnp.float32) * 0.05

    scale = 0.5
    ref = _reference(x, gamma, beta, w, b, scale)

    # Path 1: defaults (W resident, f32 matmul, single grid axis).
    out_a = jax.block_until_ready(
        sublayer_connection(x, gamma, beta, w, b, scale=scale))
    assert out_a.shape == (B, T, D)
    assert jnp.allclose(out_a, ref, atol=1e-4, rtol=1e-4)

    # Path 2: force the streamed-W path (2 column tiles) to exercise the
    # multi-axis grid + normed-scratch reuse + in-kernel residual slice.
    out_b = jax.block_until_ready(
        sublayer_connection(x, gamma, beta, w, b, scale=scale, col_tile=128))
    assert jnp.allclose(out_b, ref, atol=1e-4, rtol=1e-4)

    # Path 3: row count not a multiple of 8 -> exercises the small-pad path.
    xs = x[:2, :50]
    ref_s = _reference(xs, gamma, beta, w, b, scale)
    out_c = jax.block_until_ready(
        sublayer_connection(xs, gamma, beta, w, b, scale=scale))
    assert jnp.allclose(out_c, ref_s, atol=1e-4, rtol=1e-4)

    # Path 4: bf16 weights -> bf16 MXU matmul with f32 accumulation.
    w_bf = w.astype(jnp.bfloat16)
    ref_bf = _reference(x, gamma, beta, w_bf.astype(jnp.float32), b, scale)
    out_d = jax.block_until_ready(
        sublayer_connection(x, gamma, beta, w_bf, b, scale=scale))
    assert jnp.allclose(out_d, ref_bf, atol=5e-2, rtol=5e-2)

    print("KERNEL_OK")
</pallas_src>

<mosaic_0001>
module attributes {stable_mosaic.version = 11 : i64} {
  func.func @_slc_kernel_resident_w(%arg0: i32, %arg1: memref<128x256xf32, #tpu.memory_space<vmem>>, %arg2: memref<1x256xf32, #tpu.memory_space<vmem>>, %arg3: memref<1x256xf32, #tpu.memory_space<vmem>>, %arg4: memref<256x256xf32, #tpu.memory_space<vmem>>, %arg5: memref<1x256xf32, #tpu.memory_space<vmem>>, %arg6: memref<128x256xf32, #tpu.memory_space<vmem>>) attributes {dimension_semantics = [#tpu.dimension_semantics<parallel>], iteration_bounds = array<i64: 1>, scalar_prefetch = 0 : i64, scratch_operands = 0 : i64, tpu.core_type = #tpu.core_type<tc>, window_params = [{transform_indices = @transform_0, window_bounds = array<i64: 128, 256>}, {pipeline_mode = #tpu.pipeline_mode<synchronous>, transform_indices = @transform_1, window_bounds = array<i64: 1, 256>}, {pipeline_mode = #tpu.pipeline_mode<synchronous>, transform_indices = @transform_2, window_bounds = array<i64: 1, 256>}, {pipeline_mode = #tpu.pipeline_mode<synchronous>, transform_indices = @transform_3, window_bounds = array<i64: 256, 256>}, {pipeline_mode = #tpu.pipeline_mode<synchronous>, transform_indices = @transform_4, window_bounds = array<i64: 1, 256>}, {transform_indices = @transform_5, window_bounds = array<i64: 128, 256>}]} {
    %c0 = arith.constant 0 : index
    %c0_0 = arith.constant 0 : index
    %0 = vector.load %arg1[%c0, %c0_0] : memref<128x256xf32, #tpu.memory_space<vmem>>, vector<128x256xf32>
    %c0_1 = arith.constant 0 : index
    %c0_2 = arith.constant 0 : index
    %1 = vector.load %arg2[%c0_1, %c0_2] : memref<1x256xf32, #tpu.memory_space<vmem>>, vector<1x256xf32>
    %c0_3 = arith.constant 0 : index
    %c0_4 = arith.constant 0 : index
    %2 = vector.load %arg3[%c0_3, %c0_4] : memref<1x256xf32, #tpu.memory_space<vmem>>, vector<1x256xf32>
    %cst = arith.constant dense<0.000000e+00> : vector<128xf32>
    %3 = vector.multi_reduction <add>, %0, %cst [1] : vector<128x256xf32> to vector<128xf32>
    %4 = vector.shape_cast %3 : vector<128xf32> to vector<128x1xf32>
    %cst_5 = arith.constant 2.560000e+02 : f32
    %5 = vector.broadcast %cst_5 : f32 to vector<128x1xf32>
    %6 = arith.divf %4, %5 : vector<128x1xf32>
    %7 = vector.broadcast %6 : vector<128x1xf32> to vector<128x256xf32>
    %8 = arith.subf %0, %7 : vector<128x256xf32>
    %9 = arith.mulf %8, %8 : vector<128x256xf32>
    %cst_6 = arith.constant dense<0.000000e+00> : vector<128xf32>
    %10 = vector.multi_reduction <add>, %9, %cst_6 [1] : vector<128x256xf32> to vector<128xf32>
    %11 = vector.shape_cast %10 : vector<128xf32> to vector<128x1xf32>
    %cst_7 = arith.constant 0.00392156886 : f32
    %12 = vector.broadcast %cst_7 : f32 to vector<128x1xf32>
    %13 = arith.mulf %11, %12 : vector<128x1xf32>
    %14 = math.sqrt %13 : vector<128x1xf32>
    %cst_8 = arith.constant 9.99999997E-7 : f32
    %15 = vector.broadcast %cst_8 : f32 to vector<128x1xf32>
    %16 = arith.addf %14, %15 : vector<128x1xf32>
    %17 = tpu.reciprocal %16 : vector<128x1xf32> -> vector<128x1xf32>
    %18 = vector.broadcast %17 : vector<128x1xf32> to vector<128x256xf32>
    %19 = arith.mulf %8, %18 : vector<128x256xf32>
    %20 = vector.broadcast %1 : vector<1x256xf32> to vector<128x256xf32>
    %21 = arith.mulf %20, %19 : vector<128x256xf32>
    %22 = vector.broadcast %2 : vector<1x256xf32> to vector<128x256xf32>
    %23 = arith.addf %21, %22 : vector<128x256xf32>
    %c0_9 = arith.constant 0 : index
    %c0_10 = arith.constant 0 : index
    %24 = vector.load %arg4[%c0_9, %c0_10] : memref<256x256xf32, #tpu.memory_space<vmem>>, vector<256x256xf32>
    %cst_11 = arith.constant dense<0.000000e+00> : vector<128x256xf32>
    %25 = tpu.matmul %23, %24, %cst_11 {dimension_numbers = #tpu.dot_dimension_numbers<[1], [0], [0], [1], [0, 0, 1, 1], [], []>} : vector<128x256xf32>, vector<256x256xf32>, vector<128x256xf32> -> vector<128x256xf32>
    %c0_12 = arith.constant 0 : index
    %c0_13 = arith.constant 0 : index
    %26 = vector.load %arg5[%c0_12, %c0_13] : memref<1x256xf32, #tpu.memory_space<vmem>>, vector<1x256xf32>
    %27 = vector.broadcast %26 : vector<1x256xf32> to vector<128x256xf32>
    %28 = arith.addf %25, %27 : vector<128x256xf32>
    %cst_14 = arith.constant 5.000000e-01 : f32
    %29 = vector.broadcast %cst_14 : f32 to vector<128x256xf32>
    %30 = arith.mulf %29, %28 : vector<128x256xf32>
    %31 = arith.addf %0, %30 : vector<128x256xf32>
    %c0_15 = arith.constant 0 : index
    %c0_16 = arith.constant 0 : index
    %32 = vector.load %arg6[%c0_15, %c0_16] : memref<128x256xf32, #tpu.memory_space<vmem>>, vector<128x256xf32>
    tpu.vector_store %arg6[%c0_15, %c0_16], %31 {strides = array<i32>} : memref<128x256xf32, #tpu.memory_space<vmem>>, vector<128x256xf32>,
    return
  }
  func.func @transform_0(%arg0: i32) -> (i32, i32) {
    %c0_i32 = arith.constant 0 : i32
    %c0_i32_0 = arith.constant 0 : i32
    return %arg0, %c0_i32 : i32, i32
  }
  func.func @transform_1(%arg0: i32) -> (i32, i32) {
    %c0_i32 = arith.constant 0 : i32
    %c0_i32_0 = arith.constant 0 : i32
    %c0_i32_1 = arith.constant 0 : i32
    return %c0_i32, %c0_i32_0 : i32, i32
  }
  func.func @transform_2(%arg0: i32) -> (i32, i32) {
    %c0_i32 = arith.constant 0 : i32
    %c0_i32_0 = arith.constant 0 : i32
    %c0_i32_1 = arith.constant 0 : i32
    return %c0_i32, %c0_i32_0 : i32, i32
  }
  func.func @transform_3(%arg0: i32) -> (i32, i32) {
    %c0_i32 = arith.constant 0 : i32
    %c0_i32_0 = arith.constant 0 : i32
    %c0_i32_1 = arith.constant 0 : i32
    return %c0_i32, %c0_i32_0 : i32, i32
  }
  func.func @transform_4(%arg0: i32) -> (i32, i32) {
    %c0_i32 = arith.constant 0 : i32
    %c0_i32_0 = arith.constant 0 : i32
    %c0_i32_1 = arith.constant 0 : i32
    return %c0_i32, %c0_i32_0 : i32, i32
  }
  func.func @transform_5(%arg0: i32) -> (i32, i32) {
    %c0_i32 = arith.constant 0 : i32
    %c0_i32_0 = arith.constant 0 : i32
    return %arg0, %c0_i32 : i32, i32
  }
}

</mosaic_0001>

<llo_original>
// kernel: tpu_custom_call.1
$region0: #{tpu_custom_call.1}
  #allocation0 [shape = 'u32[]', space=smem, size = 0x4, offset = 0x4, fixed_abs, tag = 'smem constant byte address 0x4 - core index']
  #allocation1 [shape = 'u32[144,128]{1,0:T(1,128)}', space=vmem, size = 0x12000, scoped, tag = 'internal scratch']
  %s0 = inlined_call_operand.hbm [shape: f32[128,256], index: 0, kind: input, shape index: {}]
  %s1 = inlined_call_operand.vmem [shape: f32[1,256], index: 1, kind: input, shape index: {}]
  %s2 = inlined_call_operand.vmem [shape: f32[1,256], index: 2, kind: input, shape index: {}]
  %s3 = inlined_call_operand.hbm [shape: f32[256,256], index: 3, kind: input, shape index: {}]
  %s4 = inlined_call_operand.vmem [shape: f32[1,256], index: 4, kind: input, shape index: {}]
  %s5 = inlined_call_operand.hbm [shape: f32[128,256], index: 5, kind: output, shape index: {}]
  %s6 = sld [smem:[#allocation0]]
  $region38: #{tpu_custom_call.1} parent=0
    _
  %s8 = ssub.s32 1, %s6
  %s9 = scalar_select 0, %s8, %s6
  $region1: #{tpu_custom_call.1} parent=0
    #allocation2 [shape = 'u8[131072]{0}', space=vmem, size = 0x20000, scoped, tag = 'input window, operand 0, single buffered']
    #allocation3 [shape = 's32[1]{0}', space=sflag, size = 0x4, scoped, tag = 'scoped memory for tpu_custom_call.1']
    #allocation4 [shape = 's32[1]{0}', space=sflag, size = 0x4, scoped, tag = 'scoped memory for tpu_custom_call.1']
    #allocation5 [shape = 'u8[262144]{0}', space=vmem, size = 0x40000, scoped, tag = 'input window, operand 3, single buffered']
    #allocation6 [shape = 's32[1]{0}', space=sflag, size = 0x4, scoped, tag = 'scoped memory for tpu_custom_call.1']
    #allocation7 [shape = 'u8[131072]{0}', space=vmem, size = 0x20000, scoped, tag = 'output window, operand 0, single buffered']
    %10 = vsyncpa [#allocation3], 0
    %11 = vsyncpa [#allocation6], 0
    %12 = vsyncpa [#allocation4], 0
    // Predicated region
    $region2: #{tpu_custom_call.1} parent=1 // pred_check
      _
    $region3: #{tpu_custom_call.1} parent=1 // pred_check_branch
      %14 = sbr.rel (0) target = $region5
    $region4: #{tpu_custom_call.1} parent=1 // pred_region
      %s16 = ssub.s32 4096, 4096
      %17 = vsyncadd [#allocation3], %s16
      %s18 = sshll.u32 [#allocation2], 4
      %s19 = int_to_ptr.vmem [resolvable:$true] %s18
      %24 = dma.hbm_to_vmem [thread:$0]  %s0, 4096, %s19, [#allocation3], 256, 256, 16
    $region5: #{tpu_custom_call.1} parent=1 // pred_fallthru
      _
    // Predicated region
    $region6: #{tpu_custom_call.1} parent=1 // pred_check
      _
    $region7: #{tpu_custom_call.1} parent=1 // pred_check_branch
      %26 = sbr.rel (0) target = $region9
    $region8: #{tpu_custom_call.1} parent=1 // pred_region
      _
    $region9: #{tpu_custom_call.1} parent=1 // pred_fallthru
      _
    // Predicated region
    $region10: #{tpu_custom_call.1} parent=1 // pred_check
      _
    $region11: #{tpu_custom_call.1} parent=1 // pred_check_branch
      %28 = sbr.rel (0) target = $region13
    $region12: #{tpu_custom_call.1} parent=1 // pred_region
      _
    $region13: #{tpu_custom_call.1} parent=1 // pred_fallthru
      _
    // Predicated region
    $region14: #{tpu_custom_call.1} parent=1 // pred_check
      _
    $region15: #{tpu_custom_call.1} parent=1 // pred_check_branch
      %30 = sbr.rel (0) target = $region17
    $region16: #{tpu_custom_call.1} parent=1 // pred_region
      %s32 = ssub.s32 8192, 8192
      %33 = vsyncadd [#allocation6], %s32
      %s34 = sshll.u32 [#allocation5], 4
      %s35 = int_to_ptr.vmem [resolvable:$true] %s34
      %40 = dma.hbm_to_vmem [thread:$0]  %s3, 8192, %s35, [#allocation6], 256, 256, 16
    $region17: #{tpu_custom_call.1} parent=1 // pred_fallthru
      _
    // Predicated region
    $region18: #{tpu_custom_call.1} parent=1 // pred_check
      _
    $region19: #{tpu_custom_call.1} parent=1 // pred_check_branch
      %42 = sbr.rel (0) target = $region21
    $region20: #{tpu_custom_call.1} parent=1 // pred_region
      _
    $region21: #{tpu_custom_call.1} parent=1 // pred_fallthru
      _
    // Predicated region
    $region22: #{tpu_custom_call.1} parent=1 // pred_check
      _
    $region23: #{tpu_custom_call.1} parent=1 // pred_check_branch
      %44 = sbr.rel (0) target = $region25
    $region24: #{tpu_custom_call.1} parent=1 // pred_region
      %45 = dma.done [#allocation3], 4096
    $region25: #{tpu_custom_call.1} parent=1 // pred_fallthru
      _
    // Predicated region
    $region26: #{tpu_custom_call.1} parent=1 // pred_check
      _
    $region27: #{tpu_custom_call.1} parent=1 // pred_check_branch
      %47 = sbr.rel (0) target = $region29
    $region28: #{tpu_custom_call.1} parent=1 // pred_region
      %48 = dma.done [#allocation6], 8192
    $region29: #{tpu_custom_call.1} parent=1 // pred_fallthru
      _
    %v49 = vld [vmem:[#allocation2] sm:$0xff]
    %v50 = vld [vmem:[#allocation2 + $0x8] sm:$0xff]
    %v51 = vld [vmem:[#allocation2 + $0x10] sm:$0xff]
    %v52 = vld [vmem:[#allocation2 + $0x18] sm:$0xff]
    %v53 = vld [vmem:[#allocation2 + $0x20] sm:$0xff]
    %v54 = vld [vmem:[#allocation2 + $0x28] sm:$0xff]
    %v55 = vld [vmem:[#allocation2 + $0x30] sm:$0xff]
    %v56 = vld [vmem:[#allocation2 + $0x38] sm:$0xff]
    %v57 = vld [vmem:[#allocation2 + $0x40] sm:$0xff]
    %v58 = vld [vmem:[#allocation2 + $0x48] sm:$0xff]
    %v59 = vld [vmem:[#allocation2 + $0x50] sm:$0xff]
    %v60 = vld [vmem:[#allocation2 + $0x58] sm:$0xff]
    %v61 = vld [vmem:[#allocation2 + $0x60] sm:$0xff]
    %v62 = vld [vmem:[#allocation2 + $0x68] sm:$0xff]
    %v63 = vld [vmem:[#allocation2 + $0x70] sm:$0xff]
    %v64 = vld [vmem:[#allocation2 + $0x78] sm:$0xff]
    %v65 = vld [vmem:[#allocation2 + $0x80] sm:$0xff]
    %v66 = vld [vmem:[#allocation2 + $0x88] sm:$0xff]
    %v67 = vld [vmem:[#allocation2 + $0x90] sm:$0xff]
    %v68 = vld [vmem:[#allocation2 + $0x98] sm:$0xff]
    %v69 = vld [vmem:[#allocation2 + $0xa0] sm:$0xff]
    %v70 = vld [vmem:[#allocation2 + $0xa8] sm:$0xff]
    %v71 = vld [vmem:[#allocation2 + $0xb0] sm:$0xff]
    %v72 = vld [vmem:[#allocation2 + $0xb8] sm:$0xff]
    %v73 = vld [vmem:[#allocation2 + $0xc0] sm:$0xff]
    %v74 = vld [vmem:[#allocation2 + $0xc8] sm:$0xff]
    %v75 = vld [vmem:[#allocation2 + $0xd0] sm:$0xff]
    %v76 = vld [vmem:[#allocation2 + $0xd8] sm:$0xff]
    %v77 = vld [vmem:[#allocation2 + $0xe0] sm:$0xff]
    %v78 = vld [vmem:[#allocation2 + $0xe8] sm:$0xff]
    %v79 = vld [vmem:[#allocation2 + $0xf0] sm:$0xff]
    %v80 = vld [vmem:[#allocation2 + $0xf8] sm:$0xff]
    %v81 = vld [vmem:[%s1] sm:$0x3]
    %v82 = vld [vmem:[%s2] sm:$0x3]
    %v83 = vadd.f32 %v49, %v50
    %84 = vadd.xlane.f32.xlu0 %v83
    %v85 = vpop.xlane.xlu0 %84
    %v86 = vadd.f32 %v51, %v52
    %87 = vadd.xlane.f32.xlu0 %v86
    %v88 = vpop.xlane.xlu0 %87
    %v89 = vadd.f32 %v53, %v54
    %90 = vadd.xlane.f32.xlu0 %v89
    %v91 = vpop.xlane.xlu0 %90
    %v92 = vadd.f32 %v55, %v56
    %93 = vadd.xlane.f32.xlu0 %v92
    %v94 = vpop.xlane.xlu0 %93
    %v95 = vadd.f32 %v57, %v58
    %96 = vadd.xlane.f32.xlu0 %v95
    %v97 = vpop.xlane.xlu0 %96
    %v98 = vadd.f32 %v59, %v60
    %99 = vadd.xlane.f32.xlu0 %v98
    %v100 = vpop.xlane.xlu0 %99
    %v101 = vadd.f32 %v61, %v62
    %102 = vadd.xlane.f32.xlu0 %v101
    %v103 = vpop.xlane.xlu0 %102
    %v104 = vadd.f32 %v63, %v64
    %105 = vadd.xlane.f32.xlu0 %v104
    %v106 = vpop.xlane.xlu0 %105
    %v107 = vadd.f32 %v65, %v66
    %108 = vadd.xlane.f32.xlu0 %v107
    %v109 = vpop.xlane.xlu0 %108
    %v110 = vadd.f32 %v67, %v68
    %111 = vadd.xlane.f32.xlu0 %v110
    %v112 = vpop.xlane.xlu0 %111
    %v113 = vadd.f32 %v69, %v70
    %114 = vadd.xlane.f32.xlu0 %v113
    %v115 = vpop.xlane.xlu0 %114
    %v116 = vadd.f32 %v71, %v72
    %117 = vadd.xlane.f32.xlu0 %v116
    %v118 = vpop.xlane.xlu0 %117
    %v119 = vadd.f32 %v73, %v74
    %120 = vadd.xlane.f32.xlu0 %v119
    %v121 = vpop.xlane.xlu0 %120
    %v122 = vadd.f32 %v75, %v76
    %123 = vadd.xlane.f32.xlu0 %v122
    %v124 = vpop.xlane.xlu0 %123
    %v125 = vadd.f32 %v77, %v78
    %126 = vadd.xlane.f32.xlu0 %v125
    %v127 = vpop.xlane.xlu0 %126
    %v128 = vadd.f32 %v79, %v80
    %129 = vadd.xlane.f32.xlu0 %v128
    %v130 = vpop.xlane.xlu0 %129
    %v131 = vrcp.pop 256.0
    %v132 = vmul.f32 %v85, %v131
    %v133 = vmul.f32 %v88, %v131
    %v134 = vmul.f32 %v91, %v131
    %v135 = vmul.f32 %v94, %v131
    %v136 = vmul.f32 %v97, %v131
    %v137 = vmul.f32 %v100, %v131
    %v138 = vmul.f32 %v103, %v131
    %v139 = vmul.f32 %v106, %v131
    %v140 = vmul.f32 %v109, %v131
    %v141 = vmul.f32 %v112, %v131
    %v142 = vmul.f32 %v115, %v131
    %v143 = vmul.f32 %v118, %v131
    %v144 = vmul.f32 %v121, %v131
    %v145 = vmul.f32 %v124, %v131
    %v146 = vmul.f32 %v127, %v131
    %v147 = vmul.f32 %v130, %v131
    %v148 = vsub.f32 %v49, %v132
    %v149 = vsub.f32 %v50, %v132
    %v150 = vsub.f32 %v51, %v133
    %v151 = vsub.f32 %v52, %v133
    %v152 = vsub.f32 %v53, %v134
    %v153 = vsub.f32 %v54, %v134
    %v154 = vsub.f32 %v55, %v135
    %v155 = vsub.f32 %v56, %v135
    %v156 = vsub.f32 %v57, %v136
    %v157 = vsub.f32 %v58, %v136
    %v158 = vsub.f32 %v59, %v137
    %v159 = vsub.f32 %v60, %v137
    %v160 = vsub.f32 %v61, %v138
    %v161 = vsub.f32 %v62, %v138
    %v162 = vsub.f32 %v63, %v139
    %v163 = vsub.f32 %v64, %v139
    %v164 = vsub.f32 %v65, %v140
    %v165 = vsub.f32 %v66, %v140
    %v166 = vsub.f32 %v67, %v141
    %v167 = vsub.f32 %v68, %v141
    %v168 = vsub.f32 %v69, %v142
    %v169 = vsub.f32 %v70, %v142
    %v170 = vsub.f32 %v71, %v143
    %v171 = vsub.f32 %v72, %v143
    %v172 = vsub.f32 %v73, %v144
    %v173 = vsub.f32 %v74, %v144
    %v174 = vsub.f32 %v75, %v145
    %v175 = vsub.f32 %v76, %v145
    %v176 = vsub.f32 %v77, %v146
    %v177 = vsub.f32 %v78, %v146
    %v178 = vsub.f32 %v79, %v147
    %v179 = vsub.f32 %v80, %v147
    %v180 = vmul.f32 %v148, %v148
    %v181 = vmul.f32 %v149, %v149
    %v182 = vmul.f32 %v150, %v150
    %v183 = vmul.f32 %v151, %v151
    %v184 = vmul.f32 %v152, %v152
    %v185 = vmul.f32 %v153, %v153
    %v186 = vmul.f32 %v154, %v154
    %v187 = vmul.f32 %v155, %v155
    %v188 = vmul.f32 %v156, %v156
    %v189 = vmul.f32 %v157, %v157
    %v190 = vmul.f32 %v158, %v158
    %v191 = vmul.f32 %v159, %v159
    %v192 = vmul.f32 %v160, %v160
    %v193 = vmul.f32 %v161, %v161
    %v194 = vmul.f32 %v162, %v162
    %v195 = vmul.f32 %v163, %v163
    %v196 = vmul.f32 %v164, %v164
    %v197 = vmul.f32 %v165, %v165
    %v198 = vmul.f32 %v166, %v166
    %v199 = vmul.f32 %v167, %v167
    %v200 = vmul.f32 %v168, %v168
    %v201 = vmul.f32 %v169, %v169
    %v202 = vmul.f32 %v170, %v170
    %v203 = vmul.f32 %v171, %v171
    %v204 = vmul.f32 %v172, %v172
    %v205 = vmul.f32 %v173, %v173
    %v206 = vmul.f32 %v174, %v174
    %v207 = vmul.f32 %v175, %v175
    %v208 = vmul.f32 %v176, %v176
    %v209 = vmul.f32 %v177, %v177
    %v210 = vmul.f32 %v178, %v178
    %v211 = vmul.f32 %v179, %v179
    %v212 = vadd.f32 %v180, %v181
    %213 = vadd.xlane.f32.xlu0 %v212
    %v214 = vpop.xlane.xlu0 %213
    %v215 = vadd.f32 %v182, %v183
    %216 = vadd.xlane.f32.xlu0 %v215
    %v217 = vpop.xlane.xlu0 %216
    %v218 = vadd.f32 %v184, %v185
    %219 = vadd.xlane.f32.xlu0 %v218
    %v220 = vpop.xlane.xlu0 %219
    %v221 = vadd.f32 %v186, %v187
    %222 = vadd.xlane.f32.xlu0 %v221
    %v223 = vpop.xlane.xlu0 %222
    %v224 = vadd.f32 %v188, %v189
    %225 = vadd.xlane.f32.xlu0 %v224
    %v226 = vpop.xlane.xlu0 %225
    %v227 = vadd.f32 %v190, %v191
    %228 = vadd.xlane.f32.xlu0 %v227
    %v229 = vpop.xlane.xlu0 %228
    %v230 = vadd.f32 %v192, %v193
    %231 = vadd.xlane.f32.xlu0 %v230
    %v232 = vpop.xlane.xlu0 %231
    %v233 = vadd.f32 %v194, %v195
    %234 = vadd.xlane.f32.xlu0 %v233
    %v235 = vpop.xlane.xlu0 %234
    %v236 = vadd.f32 %v196, %v197
    %237 = vadd.xlane.f32.xlu0 %v236
    %v238 = vpop.xlane.xlu0 %237
    %v239 = vadd.f32 %v198, %v199
    %240 = vadd.xlane.f32.xlu0 %v239
    %v241 = vpop.xlane.xlu0 %240
    %v242 = vadd.f32 %v200, %v201
    %243 = vadd.xlane.f32.xlu0 %v242
    %v244 = vpop.xlane.xlu0 %243
    %v245 = vadd.f32 %v202, %v203
    %246 = vadd.xlane.f32.xlu0 %v245
    %v247 = vpop.xlane.xlu0 %246
    %v248 = vadd.f32 %v204, %v205
    %249 = vadd.xlane.f32.xlu0 %v248
    %v250 = vpop.xlane.xlu0 %249
    %v251 = vadd.f32 %v206, %v207
    %252 = vadd.xlane.f32.xlu0 %v251
    %v253 = vpop.xlane.xlu0 %252
    %v254 = vadd.f32 %v208, %v209
    %255 = vadd.xlane.f32.xlu0 %v254
    %v256 = vpop.xlane.xlu0 %255
    %v257 = vadd.f32 %v210, %v211
    %258 = vadd.xlane.f32.xlu0 %v257
    %v259 = vpop.xlane.xlu0 %258
    %v260 = vmul.f32 %v214, 0.003921569
    %v261 = vmul.f32 %v217, 0.003921569
    %v262 = vmul.f32 %v220, 0.003921569
    %v263 = vmul.f32 %v223, 0.003921569
    %v264 = vmul.f32 %v226, 0.003921569
    %v265 = vmul.f32 %v229, 0.003921569
    %v266 = vmul.f32 %v232, 0.003921569
    %v267 = vmul.f32 %v235, 0.003921569
    %v268 = vmul.f32 %v238, 0.003921569
    %v269 = vmul.f32 %v241, 0.003921569
    %v270 = vmul.f32 %v244, 0.003921569
    %v271 = vmul.f32 %v247, 0.003921569
    %v272 = vmul.f32 %v250, 0.003921569
    %v273 = vmul.f32 %v253, 0.003921569
    %v274 = vmul.f32 %v256, 0.003921569
    %v275 = vmul.f32 %v259, 0.003921569
    %v276 = vrsqrt.pop %v260
    %v277 = vmul.f32 %v260, %v276
    %vm278 = vcmp.eq.f32.partialorder %v260, inf
    %v279 = vsel %vm278, %v260, %v277
    %vm280 = vcmp.eq.f32.partialorder %v260, 0.0
    %v281 = vand.u32 %v260, 2147483648
    %v282 = vsel %vm280, %v281, %v279
    %v283 = vrsqrt.pop %v261
    %v284 = vmul.f32 %v261, %v283
    %vm285 = vcmp.eq.f32.partialorder %v261, inf
    %v286 = vsel %vm285, %v261, %v284
    %vm287 = vcmp.eq.f32.partialorder %v261, 0.0
    %v288 = vand.u32 %v261, 2147483648
    %v289 = vsel %vm287, %v288, %v286
    %v290 = vrsqrt.pop %v262
    %v291 = vmul.f32 %v262, %v290
    %vm292 = vcmp.eq.f32.partialorder %v262, inf
    %v293 = vsel %vm292, %v262, %v291
    %vm294 = vcmp.eq.f32.partialorder %v262, 0.0
    %v295 = vand.u32 %v262, 2147483648
    %v296 = vsel %vm294, %v295, %v293
    %v297 = vrsqrt.pop %v263
    %v298 = vmul.f32 %v263, %v297
    %vm299 = vcmp.eq.f32.partialorder %v263, inf
    %v300 = vsel %vm299, %v263, %v298
    %vm301 = vcmp.eq.f32.partialorder %v263, 0.0
    %v302 = vand.u32 %v263, 2147483648
    %v303 = vsel %vm301, %v302, %v300
    %v304 = vrsqrt.pop %v264
    %v305 = vmul.f32 %v264, %v304
    %vm306 = vcmp.eq.f32.partialorder %v264, inf
    %v307 = vsel %vm306, %v264, %v305
    %vm308 = vcmp.eq.f32.partialorder %v264, 0.0
    %v309 = vand.u32 %v264, 2147483648
    %v310 = vsel %vm308, %v309, %v307
    %v311 = vrsqrt.pop %v265
    %v312 = vmul.f32 %v265, %v311
    %vm313 = vcmp.eq.f32.partialorder %v265, inf
    %v314 = vsel %vm313, %v265, %v312
    %vm315 = vcmp.eq.f32.partialorder %v265, 0.0
    %v316 = vand.u32 %v265, 2147483648
    %v317 = vsel %vm315, %v316, %v314
    %v318 = vrsqrt.pop %v266
    %v319 = vmul.f32 %v266, %v318
    %vm320 = vcmp.eq.f32.partialorder %v266, inf
    %v321 = vsel %vm320, %v266, %v319
    %vm322 = vcmp.eq.f32.partialorder %v266, 0.0
    %v323 = vand.u32 %v266, 2147483648
    %v324 = vsel %vm322, %v323, %v321
    %v325 = vrsqrt.pop %v267
    %v326 = vmul.f32 %v267, %v325
    %vm327 = vcmp.eq.f32.partialorder %v267, inf
    %v328 = vsel %vm327, %v267, %v326
    %vm329 = vcmp.eq.f32.partialorder %v267, 0.0
    %v330 = vand.u32 %v267, 2147483648
    %v331 = vsel %vm329, %v330, %v328
    %v332 = vrsqrt.pop %v268
    %v333 = vmul.f32 %v268, %v332
    %vm334 = vcmp.eq.f32.partialorder %v268, inf
    %v335 = vsel %vm334, %v268, %v333
    %vm336 = vcmp.eq.f32.partialorder %v268, 0.0
    %v337 = vand.u32 %v268, 2147483648
    %v338 = vsel %vm336, %v337, %v335
    %v339 = vrsqrt.pop %v269
    %v340 = vmul.f32 %v269, %v339
    %vm341 = vcmp.eq.f32.partialorder %v269, inf
    %v342 = vsel %vm341, %v269, %v340
    %vm343 = vcmp.eq.f32.partialorder %v269, 0.0
    %v344 = vand.u32 %v269, 2147483648
    %v345 = vsel %vm343, %v344, %v342
    %v346 = vrsqrt.pop %v270
    %v347 = vmul.f32 %v270, %v346
    %vm348 = vcmp.eq.f32.partialorder %v270, inf
    %v349 = vsel %vm348, %v270, %v347
    %vm350 = vcmp.eq.f32.partialorder %v270, 0.0
    %v351 = vand.u32 %v270, 2147483648
    %v352 = vsel %vm350, %v351, %v349
    %v353 = vrsqrt.pop %v271
    %v354 = vmul.f32 %v271, %v353
    %vm355 = vcmp.eq.f32.partialorder %v271, inf
    %v356 = vsel %vm355, %v271, %v354
    %vm357 = vcmp.eq.f32.partialorder %v271, 0.0
    %v358 = vand.u32 %v271, 2147483648
    %v359 = vsel %vm357, %v358, %v356
    %v360 = vrsqrt.pop %v272
    %v361 = vmul.f32 %v272, %v360
    %vm362 = vcmp.eq.f32.partialorder %v272, inf
    %v363 = vsel %vm362, %v272, %v361
    %vm364 = vcmp.eq.f32.partialorder %v272, 0.0
    %v365 = vand.u32 %v272, 2147483648
    %v366 = vsel %vm364, %v365, %v363
    %v367 = vrsqrt.pop %v273
    %v368 = vmul.f32 %v273, %v367
    %vm369 = vcmp.eq.f32.partialorder %v273, inf
    %v370 = vsel %vm369, %v273, %v368
    %vm371 = vcmp.eq.f32.partialorder %v273, 0.0
    %v372 = vand.u32 %v273, 2147483648
    %v373 = vsel %vm371, %v372, %v370
    %v374 = vrsqrt.pop %v274
    %v375 = vmul.f32 %v274, %v374
    %vm376 = vcmp.eq.f32.partialorder %v274, inf
    %v377 = vsel %vm376, %v274, %v375
    %vm378 = vcmp.eq.f32.partialorder %v274, 0.0
    %v379 = vand.u32 %v274, 2147483648
    %v380 = vsel %vm378, %v379, %v377
    %v381 = vrsqrt.pop %v275
    %v382 = vmul.f32 %v275, %v381
    %vm383 = vcmp.eq.f32.partialorder %v275, inf
    %v384 = vsel %vm383, %v275, %v382
    %vm385 = vcmp.eq.f32.partialorder %v275, 0.0
    %v386 = vand.u32 %v275, 2147483648
    %v387 = vsel %vm385, %v386, %v384
    %v388 = vadd.f32 %v282, 1e-06
    %v389 = vadd.f32 %v289, 1e-06
    %v390 = vadd.f32 %v296, 1e-06
    %v391 = vadd.f32 %v303, 1e-06
    %v392 = vadd.f32 %v310, 1e-06
    %v393 = vadd.f32 %v317, 1e-06
    %v394 = vadd.f32 %v324, 1e-06
    %v395 = vadd.f32 %v331, 1e-06
    %v396 = vadd.f32 %v338, 1e-06
    %v397 = vadd.f32 %v345, 1e-06
    %v398 = vadd.f32 %v352, 1e-06
    %v399 = vadd.f32 %v359, 1e-06
    %v400 = vadd.f32 %v366, 1e-06
    %v401 = vadd.f32 %v373, 1e-06
    %v402 = vadd.f32 %v380, 1e-06
    %v403 = vadd.f32 %v387, 1e-06
    %v404 = vrcp.pop %v388
    %v405 = vrcp.pop %v389
    %v406 = vrcp.pop %v390
    %v407 = vrcp.pop %v391
    %v408 = vrcp.pop %v392
    %v409 = vrcp.pop %v393
    %v410 = vrcp.pop %v394
    %v411 = vrcp.pop %v395
    %v412 = vrcp.pop %v396
    %v413 = vrcp.pop %v397
    %v414 = vrcp.pop %v398
    %v415 = vrcp.pop %v399
    %v416 = vrcp.pop %v400
    %v417 = vrcp.pop %v401
    %v418 = vrcp.pop %v402
    %v419 = vrcp.pop %v403
    %v420 = vmul.f32 %v148, %v404
    %v421 = vmul.f32 %v149, %v404
    %v422 = vmul.f32 %v150, %v405
    %v423 = vmul.f32 %v151, %v405
    %v424 = vmul.f32 %v152, %v406
    %v425 = vmul.f32 %v153, %v406
    %v426 = vmul.f32 %v154, %v407
    %v427 = vmul.f32 %v155, %v407
    %v428 = vmul.f32 %v156, %v408
    %v429 = vmul.f32 %v157, %v408
    %v430 = vmul.f32 %v158, %v409
    %v431 = vmul.f32 %v159, %v409
    %v432 = vmul.f32 %v160, %v410
    %v433 = vmul.f32 %v161, %v410
    %v434 = vmul.f32 %v162, %v411
    %v435 = vmul.f32 %v163, %v411
    %v436 = vmul.f32 %v164, %v412
    %v437 = vmul.f32 %v165, %v412
    %v438 = vmul.f32 %v166, %v413
    %v439 = vmul.f32 %v167, %v413
    %v440 = vmul.f32 %v168, %v414
    %v441 = vmul.f32 %v169, %v414
    %v442 = vmul.f32 %v170, %v415
    %v443 = vmul.f32 %v171, %v415
    %v444 = vmul.f32 %v172, %v416
    %v445 = vmul.f32 %v173, %v416
    %v446 = vmul.f32 %v174, %v417
    %v447 = vmul.f32 %v175, %v417
    %v448 = vmul.f32 %v176, %v418
    %v449 = vmul.f32 %v177, %v418
    %v450 = vmul.f32 %v178, %v419
    %v451 = vmul.f32 %v179, %v419
    %v453 = vlaneseq
    %v454 = vshrl.u32 %v453, 7
    %v455 = vsub.s32 0, %v454
    %v456 = vrot.slane %v81, %v455
    %v457 = vlaneseq
    %v458 = vshrl.u32 %v457, 7
    %v459 = vsub.s32 1, %v458
    %v460 = vrot.slane %v81, %v459
    %v463 = vmul.f32 %v456, %v420
    %v464 = vmul.f32 %v460, %v421
    %v465 = vmul.f32 %v456, %v422
    %v466 = vmul.f32 %v460, %v423
    %v467 = vmul.f32 %v456, %v424
    %v468 = vmul.f32 %v460, %v425
    %v469 = vmul.f32 %v456, %v426
    %v470 = vmul.f32 %v460, %v427
    %v471 = vmul.f32 %v456, %v428
    %v472 = vmul.f32 %v460, %v429
    %v473 = vmul.f32 %v456, %v430
    %v474 = vmul.f32 %v460, %v431
    %v475 = vmul.f32 %v456, %v432
    %v476 = vmul.f32 %v460, %v433
    %v477 = vmul.f32 %v456, %v434
    %v478 = vmul.f32 %v460, %v435
    %v479 = vmul.f32 %v456, %v436
    %v480 = vmul.f32 %v460, %v437
    %v481 = vmul.f32 %v456, %v438
    %v482 = vmul.f32 %v460, %v439
    %v483 = vmul.f32 %v456, %v440
    %v484 = vmul.f32 %v460, %v441
    %v485 = vmul.f32 %v456, %v442
    %v486 = vmul.f32 %v460, %v443
    %v487 = vmul.f32 %v456, %v444
    %v488 = vmul.f32 %v460, %v445
    %v489 = vmul.f32 %v456, %v446
    %v490 = vmul.f32 %v460, %v447
    %v491 = vmul.f32 %v456, %v448
    %v492 = vmul.f32 %v460, %v449
    %v493 = vmul.f32 %v456, %v450
    %v494 = vmul.f32 %v460, %v451
    %v496 = vlaneseq
    %v497 = vshrl.u32 %v496, 7
    %v498 = vsub.s32 0, %v497
    %v499 = vrot.slane %v82, %v498
    %v500 = vlaneseq
    %v501 = vshrl.u32 %v500, 7
    %v502 = vsub.s32 1, %v501
    %v503 = vrot.slane %v82, %v502
    %v506 = vadd.f32 %v463, %v499
    %v507 = vadd.f32 %v464, %v503
    %v508 = vadd.f32 %v465, %v499
    %v509 = vadd.f32 %v466, %v503
    %v510 = vadd.f32 %v467, %v499
    %v511 = vadd.f32 %v468, %v503
    %v512 = vadd.f32 %v469, %v499
    %v513 = vadd.f32 %v470, %v503
    %v514 = vadd.f32 %v471, %v499
    %v515 = vadd.f32 %v472, %v503
    %v516 = vadd.f32 %v473, %v499
    %v517 = vadd.f32 %v474, %v503
    %v518 = vadd.f32 %v475, %v499
    %v519 = vadd.f32 %v476, %v503
    %v520 = vadd.f32 %v477, %v499
    %v521 = vadd.f32 %v478, %v503
    %v522 = vadd.f32 %v479, %v499
    %v523 = vadd.f32 %v480, %v503
    %v524 = vadd.f32 %v481, %v499
    %v525 = vadd.f32 %v482, %v503
    %v526 = vadd.f32 %v483, %v499
    %v527 = vadd.f32 %v484, %v503
    %v528 = vadd.f32 %v485, %v499
    %v529 = vadd.f32 %v486, %v503
    %v530 = vadd.f32 %v487, %v499
    %v531 = vadd.f32 %v488, %v503
    %v532 = vadd.f32 %v489, %v499
    %v533 = vadd.f32 %v490, %v503
    %v534 = vadd.f32 %v491, %v499
    %v535 = vadd.f32 %v492, %v503
    %v536 = vadd.f32 %v493, %v499
    %v537 = vadd.f32 %v494, %v503
    %v538 = vld [vmem:[#allocation5] sm:$0xff]
    %v539 = vld [vmem:[#allocation5 + $0x8] sm:$0xff]
    %v540 = vld [vmem:[#allocation5 + $0x10] sm:$0xff]
    %v541 = vld [vmem:[#allocation5 + $0x18] sm:$0xff]
    %v542 = vld [vmem:[#allocation5 + $0x20] sm:$0xff]
    %v543 = vld [vmem:[#allocation5 + $0x28] sm:$0xff]
    %v544 = vld [vmem:[#allocation5 + $0x30] sm:$0xff]
    %v545 = vld [vmem:[#allocation5 + $0x38] sm:$0xff]
    %v546 = vld [vmem:[#allocation5 + $0x40] sm:$0xff]
    %v547 = vld [vmem:[#allocation5 + $0x48] sm:$0xff]
    %v548 = vld [vmem:[#allocation5 + $0x50] sm:$0xff]
    %v549 = vld [vmem:[#allocation5 + $0x58] sm:$0xff]
    %v550 = vld [vmem:[#allocation5 + $0x60] sm:$0xff]
    %v551 = vld [vmem:[#allocation5 + $0x68] sm:$0xff]
    %v552 = vld [vmem:[#allocation5 + $0x70] sm:$0xff]
    %v553 = vld [vmem:[#allocation5 + $0x78] sm:$0xff]
    %v554 = vld [vmem:[#allocation5 + $0x80] sm:$0xff]
    %v555 = vld [vmem:[#allocation5 + $0x88] sm:$0xff]
    %v556 = vld [vmem:[#allocation5 + $0x90] sm:$0xff]
    %v557 = vld [vmem:[#allocation5 + $0x98] sm:$0xff]
    %v558 = vld [vmem:[#allocation5 + $0xa0] sm:$0xff]
    %v559 = vld [vmem:[#allocation5 + $0xa8] sm:$0xff]
    %v560 = vld [vmem:[#allocation5 + $0xb0] sm:$0xff]
    %v561 = vld [vmem:[#allocation5 + $0xb8] sm:$0xff]
    %v562 = vld [vmem:[#allocation5 + $0xc0] sm:$0xff]
    %v563 = vld [vmem:[#allocation5 + $0xc8] sm:$0xff]
    %v564 = vld [vmem:[#allocation5 + $0xd0] sm:$0xff]
    %v565 = vld [vmem:[#allocation5 + $0xd8] sm:$0xff]
    %v566 = vld [vmem:[#allocation5 + $0xe0] sm:$0xff]
    %v567 = vld [vmem:[#allocation5 + $0xe8] sm:$0xff]
    %v568 = vld [vmem:[#allocation5 + $0xf0] sm:$0xff]
    %v569 = vld [vmem:[#allocation5 + $0xf8] sm:$0xff]
    %v570 = vld [vmem:[#allocation5 + $0x100] sm:$0xff]
    %v571 = vld [vmem:[#allocation5 + $0x108] sm:$0xff]
    %v572 = vld [vmem:[#allocation5 + $0x110] sm:$0xff]
    %v573 = vld [vmem:[#allocation5 + $0x118] sm:$0xff]
    %v574 = vld [vmem:[#allocation5 + $0x120] sm:$0xff]
    %v575 = vld [vmem:[#allocation5 + $0x128] sm:$0xff]
    %v576 = vld [vmem:[#allocation5 + $0x130] sm:$0xff]
    %v577 = vld [vmem:[#allocation5 + $0x138] sm:$0xff]
    %v578 = vld [vmem:[#allocation5 + $0x140] sm:$0xff]
    %v579 = vld [vmem:[#allocation5 + $0x148] sm:$0xff]
    %v580 = vld [vmem:[#allocation5 + $0x150] sm:$0xff]
    %v581 = vld [vmem:[#allocation5 + $0x158] sm:$0xff]
    %v582 = vld [vmem:[#allocation5 + $0x160] sm:$0xff]
    %v583 = vld [vmem:[#allocation5 + $0x168] sm:$0xff]
    %v584 = vld [vmem:[#allocation5 + $0x170] sm:$0xff]
    %v585 = vld [vmem:[#allocation5 + $0x178] sm:$0xff]
    %v586 = vld [vmem:[#allocation5 + $0x180] sm:$0xff]
    %v587 = vld [vmem:[#allocation5 + $0x188] sm:$0xff]
    %v588 = vld [vmem:[#allocation5 + $0x190] sm:$0xff]
    %v589 = vld [vmem:[#allocation5 + $0x198] sm:$0xff]
    %v590 = vld [vmem:[#allocation5 + $0x1a0] sm:$0xff]
    %v591 = vld [vmem:[#allocation5 + $0x1a8] sm:$0xff]
    %v592 = vld [vmem:[#allocation5 + $0x1b0] sm:$0xff]
    %v593 = vld [vmem:[#allocation5 + $0x1b8] sm:$0xff]
    %v594 = vld [vmem:[#allocation5 + $0x1c0] sm:$0xff]
    %v595 = vld [vmem:[#allocation5 + $0x1c8] sm:$0xff]
    %v596 = vld [vmem:[#allocation5 + $0x1d0] sm:$0xff]
    %v597 = vld [vmem:[#allocation5 + $0x1d8] sm:$0xff]
    %v598 = vld [vmem:[#allocation5 + $0x1e0] sm:$0xff]
    %v599 = vld [vmem:[#allocation5 + $0x1e8] sm:$0xff]
    %v600 = vld [vmem:[#allocation5 + $0x1f0] sm:$0xff]
    %v601 = vld [vmem:[#allocation5 + $0x1f8] sm:$0xff]
    %v602 = vld [vmem:[%s4] sm:$0x3]
    %v604 = vlaneseq
    %v605 = vshrl.u32 %v604, 7
    %v606 = vsub.s32 0, %v605
    %v607 = vrot.slane %v602, %v606
    %v608 = vlaneseq
    %v609 = vshrl.u32 %v608, 7
    %v610 = vsub.s32 1, %v609
    %v611 = vrot.slane %v602, %v610
    %614 = vmatprep.subr.mxu0 %v539
    %615 = vmatpush1.msra.mxu0 %v538
    %616 = vmatprep.subr.mxu0 %v541
    %617 = vmatpush1.msra.mxu0 %v540
    %618 = vmatprep.subr.mxu0 %v543
    %619 = vmatpush1.msra.mxu0 %v542
    %620 = vmatprep.subr.mxu0 %v545
    %621 = vmatpush1.msra.mxu0 %v544
    %622 = vmatprep.subr.mxu0 %v547
    %623 = vmatpush1.msra.mxu0 %v546
    %624 = vmatprep.subr.mxu0 %v549
    %625 = vmatpush1.msra.mxu0 %v548
    %626 = vmatprep.subr.mxu0 %v551
    %627 = vmatpush1.msra.mxu0 %v550
    %628 = vmatprep.subr.mxu0 %v553
    %629 = vmatpush1.msra.mxu0 %v552
    %630 = vmatprep.subr.mxu0 %v555
    %631 = vmatpush1.msra.mxu0 %v554
    %632 = vmatprep.subr.mxu0 %v557
    %633 = vmatpush1.msra.mxu0 %v556
    %634 = vmatprep.subr.mxu0 %v559
    %635 = vmatpush1.msra.mxu0 %v558
    %636 = vmatprep.subr.mxu0 %v561
    %637 = vmatpush1.msra.mxu0 %v560
    %638 = vmatprep.subr.mxu0 %v563
    %639 = vmatpush1.msra.mxu0 %v562
    %640 = vmatprep.subr.mxu0 %v565
    %641 = vmatpush1.msra.mxu0 %v564
    %642 = vmatprep.subr.mxu0 %v567
    %643 = vmatpush1.msra.mxu0 %v566
    %644 = vmatprep.subr.mxu0 %v569
    %645 = vmatpush1.msra.mxu0 %v568
    %646 = vmatprep.subr.mxu0 %v571
    %647 = vmatpush1.msra.mxu0 %v570
    %648 = vmatprep.subr.mxu0 %v573
    %649 = vmatpush1.msra.mxu0 %v572
    %650 = vmatprep.subr.mxu0 %v575
    %651 = vmatpush1.msra.mxu0 %v574
    %652 = vmatprep.subr.mxu0 %v577
    %653 = vmatpush1.msra.mxu0 %v576
    %654 = vmatprep.subr.mxu0 %v579
    %655 = vmatpush1.msra.mxu0 %v578
    %656 = vmatprep.subr.mxu0 %v581
    %657 = vmatpush1.msra.mxu0 %v580
    %658 = vmatprep.subr.mxu0 %v583
    %659 = vmatpush1.msra.mxu0 %v582
    %660 = vmatprep.subr.mxu0 %v585
    %661 = vmatpush1.msra.mxu0 %v584
    %662 = vmatprep.subr.mxu0 %v587
    %663 = vmatpush1.msra.mxu0 %v586
    %664 = vmatprep.subr.mxu0 %v589
    %665 = vmatpush1.msra.mxu0 %v588
    %666 = vmatprep.subr.mxu0 %v591
    %667 = vmatpush1.msra.mxu0 %v590
    %668 = vmatprep.subr.mxu0 %v593
    %669 = vmatpush1.msra.mxu0 %v592
    %670 = vmatprep.subr.mxu0 %v595
    %671 = vmatpush1.msra.mxu0 %v594
    %672 = vmatprep.subr.mxu0 %v597
    %673 = vmatpush1.msra.mxu0 %v596
    %674 = vmatprep.subr.mxu0 %v599
    %675 = vmatpush1.msra.mxu0 %v598
    %676 = vmatprep.subr.mxu0 %v601
    %677 = vmatpush1.msra.mxu0 %v600
    %678 = vmatprep.mubr.f32.mxu0 %v507
    %679 = vmatmul.mubr.f32.gmra.mrb[0].mxu0 %v506
    %v680 = vpop.f32.mrb[0].mxu0
    %v681 = vadd.f32 %v607, %v680
    %v682 = vpop.f32.mrb[0].mxu0
    %v683 = vadd.f32 %v611, %v682
    %684 = vmatprep.mubr.f32.mxu0 %v509
    %685 = vmatmul.mubr.f32.gmra.mrb[0].mxu0 %v508
    %v686 = vpop.f32.mrb[0].mxu0
    %v687 = vadd.f32 %v607, %v686
    %v688 = vpop.f32.mrb[0].mxu0
    %v689 = vadd.f32 %v611, %v688
    %690 = vmatprep.mubr.f32.mxu0 %v511
    %691 = vmatmul.mubr.f32.gmra.mrb[0].mxu0 %v510
    %v692 = vpop.f32.mrb[0].mxu0
    %v693 = vadd.f32 %v607, %v692
    %v694 = vpop.f32.mrb[0].mxu0
    %v695 = vadd.f32 %v611, %v694
    %696 = vmatprep.mubr.f32.mxu0 %v513
    %697 = vmatmul.mubr.f32.gmra.mrb[0].mxu0 %v512
    %v698 = vpop.f32.mrb[0].mxu0
    %v699 = vadd.f32 %v607, %v698
    %v700 = vpop.f32.mrb[0].mxu0
    %v701 = vadd.f32 %v611, %v700
    %702 = vmatprep.mubr.f32.mxu0 %v515
    %703 = vmatmul.mubr.f32.gmra.mrb[0].mxu0 %v514
    %v704 = vpop.f32.mrb[0].mxu0
    %v705 = vadd.f32 %v607, %v704
    %v706 = vpop.f32.mrb[0].mxu0
    %v707 = vadd.f32 %v611, %v706
    %708 = vmatprep.mubr.f32.mxu0 %v517
    %709 = vmatmul.mubr.f32.gmra.mrb[0].mxu0 %v516
    %v710 = vpop.f32.mrb[0].mxu0
    %v711 = vadd.f32 %v607, %v710
    %v712 = vpop.f32.mrb[0].mxu0
    %v713 = vadd.f32 %v611, %v712
    %714 = vmatprep.mubr.f32.mxu0 %v519
    %715 = vmatmul.mubr.f32.gmra.mrb[0].mxu0 %v518
    %v716 = vpop.f32.mrb[0].mxu0
    %v717 = vadd.f32 %v607, %v716
    %v718 = vpop.f32.mrb[0].mxu0
    %v719 = vadd.f32 %v611, %v718
    %720 = vmatprep.mubr.f32.mxu0 %v521
    %721 = vmatmul.mubr.f32.gmra.mrb[0].mxu0 %v520
    %v722 = vpop.f32.mrb[0].mxu0
    %v723 = vadd.f32 %v607, %v722
    %v724 = vpop.f32.mrb[0].mxu0
    %v725 = vadd.f32 %v611, %v724
    %726 = vmatprep.mubr.f32.mxu0 %v523
    %727 = vmatmul.mubr.f32.gmra.mrb[0].mxu0 %v522
    %v728 = vpop.f32.mrb[0].mxu0
    %v729 = vadd.f32 %v607, %v728
    %v730 = vpop.f32.mrb[0].mxu0
    %v731 = vadd.f32 %v611, %v730
    %732 = vmatprep.mubr.f32.mxu0 %v525
    %733 = vmatmul.mubr.f32.gmra.mrb[0].mxu0 %v524
    %v734 = vpop.f32.mrb[0].mxu0
    %v735 = vadd.f32 %v607, %v734
    %v736 = vpop.f32.mrb[0].mxu0
    %v737 = vadd.f32 %v611, %v736
    %738 = vmatprep.mubr.f32.mxu0 %v527
    %739 = vmatmul.mubr.f32.gmra.mrb[0].mxu0 %v526
    %v740 = vpop.f32.mrb[0].mxu0
    %v741 = vadd.f32 %v607, %v740
    %v742 = vpop.f32.mrb[0].mxu0
    %v743 = vadd.f32 %v611, %v742
    %744 = vmatprep.mubr.f32.mxu0 %v529
    %745 = vmatmul.mubr.f32.gmra.mrb[0].mxu0 %v528
    %v746 = vpop.f32.mrb[0].mxu0
    %v747 = vadd.f32 %v607, %v746
    %v748 = vpop.f32.mrb[0].mxu0
    %v749 = vadd.f32 %v611, %v748
    %750 = vmatprep.mubr.f32.mxu0 %v531
    %751 = vmatmul.mubr.f32.gmra.mrb[0].mxu0 %v530
    %v752 = vpop.f32.mrb[0].mxu0
    %v753 = vadd.f32 %v607, %v752
    %v754 = vpop.f32.mrb[0].mxu0
    %v755 = vadd.f32 %v611, %v754
    %756 = vmatprep.mubr.f32.mxu0 %v533
    %757 = vmatmul.mubr.f32.gmra.mrb[0].mxu0 %v532
    %v758 = vpop.f32.mrb[0].mxu0
    %v759 = vadd.f32 %v607, %v758
    %v760 = vpop.f32.mrb[0].mxu0
    %v761 = vadd.f32 %v611, %v760
    %762 = vmatprep.mubr.f32.mxu0 %v535
    %763 = vmatmul.mubr.f32.gmra.mrb[0].mxu0 %v534
    %v764 = vpop.f32.mrb[0].mxu0
    %v765 = vadd.f32 %v607, %v764
    %v766 = vpop.f32.mrb[0].mxu0
    %v767 = vadd.f32 %v611, %v766
    %768 = vmatprep.mubr.f32.mxu0 %v537
    %769 = vmatmul.mubr.f32.gmra.mrb[0].mxu0 %v536
    %v770 = vpop.f32.mrb[0].mxu0
    %v771 = vadd.f32 %v607, %v770
    %v772 = vpop.f32.mrb[0].mxu0
    %v773 = vadd.f32 %v611, %v772
    %774 = vdwg.mxu0
    %v775 = vmul.f32 %v681, 0.5
    %v776 = vmul.f32 %v683, 0.5
    %v777 = vmul.f32 %v687, 0.5
    %v778 = vmul.f32 %v689, 0.5
    %v779 = vmul.f32 %v693, 0.5
    %v780 = vmul.f32 %v695, 0.5
    %v781 = vmul.f32 %v699, 0.5
    %v782 = vmul.f32 %v701, 0.5
    %v783 = vmul.f32 %v705, 0.5
    %v784 = vmul.f32 %v707, 0.5
    %v785 = vmul.f32 %v711, 0.5
    %v786 = vmul.f32 %v713, 0.5
    %v787 = vmul.f32 %v717, 0.5
    %v788 = vmul.f32 %v719, 0.5
    %v789 = vmul.f32 %v723, 0.5
    %v790 = vmul.f32 %v725, 0.5
    %v791 = vmul.f32 %v729, 0.5
    %v792 = vmul.f32 %v731, 0.5
    %v793 = vmul.f32 %v735, 0.5
    %v794 = vmul.f32 %v737, 0.5
    %v795 = vmul.f32 %v741, 0.5
    %v796 = vmul.f32 %v743, 0.5
    %v797 = vmul.f32 %v747, 0.5
    %v798 = vmul.f32 %v749, 0.5
    %v799 = vmul.f32 %v753, 0.5
    %v800 = vmul.f32 %v755, 0.5
    %v801 = vmul.f32 %v759, 0.5
    %v802 = vmul.f32 %v761, 0.5
    %v803 = vmul.f32 %v765, 0.5
    %v804 = vmul.f32 %v767, 0.5
    %v805 = vmul.f32 %v771, 0.5
    %v806 = vmul.f32 %v773, 0.5
    %v807 = vadd.f32 %v49, %v775
    %v808 = vadd.f32 %v50, %v776
    %v809 = vadd.f32 %v51, %v777
    %v810 = vadd.f32 %v52, %v778
    %v811 = vadd.f32 %v53, %v779
    %v812 = vadd.f32 %v54, %v780
    %v813 = vadd.f32 %v55, %v781
    %v814 = vadd.f32 %v56, %v782
    %v815 = vadd.f32 %v57, %v783
    %v816 = vadd.f32 %v58, %v784
    %v817 = vadd.f32 %v59, %v785
    %v818 = vadd.f32 %v60, %v786
    %v819 = vadd.f32 %v61, %v787
    %v820 = vadd.f32 %v62, %v788
    %v821 = vadd.f32 %v63, %v789
    %v822 = vadd.f32 %v64, %v790
    %v823 = vadd.f32 %v65, %v791
    %v824 = vadd.f32 %v66, %v792
    %v825 = vadd.f32 %v67, %v793
    %v826 = vadd.f32 %v68, %v794
    %v827 = vadd.f32 %v69, %v795
    %v828 = vadd.f32 %v70, %v796
    %v829 = vadd.f32 %v71, %v797
    %v830 = vadd.f32 %v72, %v798
    %v831 = vadd.f32 %v73, %v799
    %v832 = vadd.f32 %v74, %v800
    %v833 = vadd.f32 %v75, %v801
    %v834 = vadd.f32 %v76, %v802
    %v835 = vadd.f32 %v77, %v803
    %v836 = vadd.f32 %v78, %v804
    %v837 = vadd.f32 %v79, %v805
    %v838 = vadd.f32 %v80, %v806
    %839 = vst [vmem:[#allocation7] sm:$0xff] %v807
    %840 = vst [vmem:[#allocation7 + $0x8] sm:$0xff] %v808
    %841 = vst [vmem:[#allocation7 + $0x10] sm:$0xff] %v809
    %842 = vst [vmem:[#allocation7 + $0x18] sm:$0xff] %v810
    %843 = vst [vmem:[#allocation7 + $0x20] sm:$0xff] %v811
    %844 = vst [vmem:[#allocation7 + $0x28] sm:$0xff] %v812
    %845 = vst [vmem:[#allocation7 + $0x30] sm:$0xff] %v813
    %846 = vst [vmem:[#allocation7 + $0x38] sm:$0xff] %v814
    %847 = vst [vmem:[#allocation7 + $0x40] sm:$0xff] %v815
    %848 = vst [vmem:[#allocation7 + $0x48] sm:$0xff] %v816
    %849 = vst [vmem:[#allocation7 + $0x50] sm:$0xff] %v817
    %850 = vst [vmem:[#allocation7 + $0x58] sm:$0xff] %v818
    %851 = vst [vmem:[#allocation7 + $0x60] sm:$0xff] %v819
    %852 = vst [vmem:[#allocation7 + $0x68] sm:$0xff] %v820
    %853 = vst [vmem:[#allocation7 + $0x70] sm:$0xff] %v821
    %854 = vst [vmem:[#allocation7 + $0x78] sm:$0xff] %v822
    %855 = vst [vmem:[#allocation7 + $0x80] sm:$0xff] %v823
    %856 = vst [vmem:[#allocation7 + $0x88] sm:$0xff] %v824
    %857 = vst [vmem:[#allocation7 + $0x90] sm:$0xff] %v825
    %858 = vst [vmem:[#allocation7 + $0x98] sm:$0xff] %v826
    %859 = vst [vmem:[#allocation7 + $0xa0] sm:$0xff] %v827
    %860 = vst [vmem:[#allocation7 + $0xa8] sm:$0xff] %v828
    %861 = vst [vmem:[#allocation7 + $0xb0] sm:$0xff] %v829
    %862 = vst [vmem:[#allocation7 + $0xb8] sm:$0xff] %v830
    %863 = vst [vmem:[#allocation7 + $0xc0] sm:$0xff] %v831
    %864 = vst [vmem:[#allocation7 + $0xc8] sm:$0xff] %v832
    %865 = vst [vmem:[#allocation7 + $0xd0] sm:$0xff] %v833
    %866 = vst [vmem:[#allocation7 + $0xd8] sm:$0xff] %v834
    %867 = vst [vmem:[#allocation7 + $0xe0] sm:$0xff] %v835
    %868 = vst [vmem:[#allocation7 + $0xe8] sm:$0xff] %v836
    %869 = vst [vmem:[#allocation7 + $0xf0] sm:$0xff] %v837
    %870 = vst [vmem:[#allocation7 + $0xf8] sm:$0xff] %v838
    // Predicated region
    $region30: #{tpu_custom_call.1} parent=1 // pred_check
      _
    $region31: #{tpu_custom_call.1} parent=1 // pred_check_branch
      %872 = sbr.rel (0) target = $region33
    $region32: #{tpu_custom_call.1} parent=1 // pred_region
      %s874 = ssub.s32 4096, 4096
      %875 = vsyncadd [#allocation4], %s874
      %s876 = sshll.u32 [#allocation7], 4
      %s877 = int_to_ptr.vmem [resolvable:$true] %s876
      %882 = dma.vmem_to_hbm [thread:$0]  %s877, 4096, %s5, [#allocation4], 256, 256, 16
    $region33: #{tpu_custom_call.1} parent=1 // pred_fallthru
      _
    // Predicated region
    $region34: #{tpu_custom_call.1} parent=1 // pred_check
      _
    $region35: #{tpu_custom_call.1} parent=1 // pred_check_branch
      %884 = sbr.rel (0) target = $region37
    $region36: #{tpu_custom_call.1} parent=1 // pred_region
      %885 = dma.done [#allocation4], 4096
    $region37: #{tpu_custom_call.1} parent=1 // pred_fallthru
      _
    %886 = vsyncpa [#allocation3], 1
    %887 = vsyncpa [#allocation6], 1
    %888 = vsyncpa [#allocation4], 1

</llo_original>
